<compile_context>
chip_gen: v7x
topology: tpu7x:2x2x1
jax: 0.10.0
libtpu: 0.0.40
codegen_flags: <defaults>
</compile_context>

<pallas_src>
import jax
import jax.numpy as jnp
from jax.experimental import pallas as pl
from jax.experimental.pallas import tpu as pltpu

_LANE = 128          # lane-dense last dim
_BLOCK_ROWS = 4096   # 4096 x 128 x f32 = 2 MiB per buffer


def _brightness_kernel(gamma_ref, img_ref, out_ref):
    # gamma_ref: SMEM (C,) float32, scalar-prefetched
    # img_ref / out_ref: VMEM (1, block_rows, 128) tile of the current channel
    c = pl.program_id(0)
    g = gamma_ref[c]
    x = img_ref[...].astype(jnp.float32)
    # x ** g for g > 0:
    #   x == 0 -> log(0) = -inf -> exp(-inf) = 0   (matches 0 ** g)
    #   x <  0 -> NaN                              (matches torch float pow)
    y = jnp.exp(g * jnp.log(x))
    # img[img > 1] = 1; img[img < 0] = 0
    y = jnp.clip(y, 0.0, 1.0)
    out_ref[...] = y.astype(out_ref.dtype)


def random_brightness_change(img, key, min_gamma=0.8, max_gamma=1.2):
    """JAX/Pallas equivalent of RandomBrightnessChange.forward.

    img: (C, H, W) array, values expected in [0, 1]. Kept in its native dtype
         through the HBM<->VMEM DMA; widened to f32 only inside the kernel.
    key: jax PRNG key used to draw the per-channel gammas.
    """
    C, H, W = img.shape
    S = H * W

    # Glue: deterministic per-channel gamma ~ U(min, max).
    gamma = jax.random.uniform(
        key, (C,), dtype=jnp.float32, minval=min_gamma, maxval=max_gamma
    )

    # Lane-dense layout: view each spatial plane as (rows, 128). When
    # H*W % 128 == 0 (typical image sizes) the reshape is a free row-major
    # view; otherwise pad with at most 127 zeros per channel.
    rows = pl.cdiv(S, _LANE)
    s_pad = rows * _LANE
    x = img.reshape(C, S)
    if s_pad != S:
        x = jnp.pad(x, ((0, 0), (0, s_pad - S)))
    x = x.reshape(C, rows, _LANE)

    # Full dim if small (always legal), otherwise a multiple of 8 sublanes.
    block_rows = min(_BLOCK_ROWS, rows)
    grid = (C, pl.cdiv(rows, block_rows))

    itemsize = jnp.dtype(img.dtype).itemsize
    cost = pl.CostEstimate(
        flops=3 * C * S,
        transcendentals=2 * C * S,
        bytes_accessed=2 * C * S * itemsize,
    )

    grid_spec = pltpu.PrefetchScalarGridSpec(
        num_scalar_prefetch=1,  # gamma lands in SMEM
        grid=grid,
        in_specs=[
            pl.BlockSpec(
                (1, block_rows, _LANE), lambda c, b, gamma_ref: (c, b, 0)
            ),
        ],
        out_specs=pl.BlockSpec(
            (1, block_rows, _LANE), lambda c, b, gamma_ref: (c, b, 0)
        ),
    )

    # TODO(synk): add input_output_aliases so the output reuses the input HBM
    # buffer when the caller donates `img`.
    out = pl.pallas_call(
        _brightness_kernel,
        out_shape=jax.ShapeDtypeStruct((C, rows, _LANE), img.dtype),
        grid_spec=grid_spec,
        compiler_params=pltpu.CompilerParams(
            dimension_semantics=("parallel", "parallel"),
        ),
        cost_estimate=cost,
    )(gamma, x)

    return out.reshape(C, s_pad)[:, :S].reshape(C, H, W)


def _reference(img, gamma):
    # Pure-JAX reference of the same math (per-channel pow, then clamp).
    y = jnp.power(img, gamma[:, None, None])
    return jnp.clip(y, 0.0, 1.0)


if __name__ == "__main__":
    key = jax.random.PRNGKey(0)
    k_img, k_gamma, k_img2, k_gamma2 = jax.random.split(key, 4)

    # Case 1: H*W is a multiple of 128 (free lane-dense view, no padding).
    C, H, W = 4, 16, 16
    img = jax.random.uniform(k_img, (C, H, W), dtype=jnp.float32)
    out = random_brightness_change(img, k_gamma, min_gamma=0.8, max_gamma=1.2)
    out = jax.block_until_ready(out)

    gamma = jax.random.uniform(
        k_gamma, (C,), dtype=jnp.float32, minval=0.8, maxval=1.2
    )
    ref = _reference(img, gamma)
    assert out.shape == (C, H, W)
    assert out.dtype == img.dtype
    assert jnp.allclose(out, ref, atol=1e-5, rtol=1e-5)
    assert float(out.max()) <= 1.0 and float(out.min()) >= 0.0

    # Case 2: H*W not a multiple of 128 (exercises the padded path).
    C2, H2, W2 = 3, 9, 13
    img2 = jax.random.uniform(k_img2, (C2, H2, W2), dtype=jnp.float32)
    out2 = random_brightness_change(img2, k_gamma2, min_gamma=0.8, max_gamma=1.2)
    out2 = jax.block_until_ready(out2)

    gamma2 = jax.random.uniform(
        k_gamma2, (C2,), dtype=jnp.float32, minval=0.8, maxval=1.2
    )
    ref2 = _reference(img2, gamma2)
    assert out2.shape == (C2, H2, W2)
    assert jnp.allclose(out2, ref2, atol=1e-5, rtol=1e-5)

    print("KERNEL_OK")
</pallas_src>

<mosaic_0001>
module attributes {stable_mosaic.version = 11 : i64} {
  func.func @_brightness_kernel(%arg0: i32, %arg1: i32, %arg2: memref<4xf32, #tpu.memory_space<smem>>, %arg3: memref<1x2x128xf32, #tpu.memory_space<vmem>>, %arg4: memref<1x2x128xf32, #tpu.memory_space<vmem>>) attributes {dimension_semantics = [#tpu.dimension_semantics<parallel>, #tpu.dimension_semantics<parallel>], iteration_bounds = array<i64: 4, 1>, scalar_prefetch = 1 : i64, scratch_operands = 0 : i64, tpu.core_type = #tpu.core_type<tc>, window_params = [{transform_indices = @transform_0, window_bounds = array<i64: 1, 2, 128>}, {transform_indices = @transform_1, window_bounds = array<i64: 1, 2, 128>}]} {
    %0 = arith.index_cast %arg0 : i32 to index
    %1 = memref.load %arg2[%0] : memref<4xf32, #tpu.memory_space<smem>>
    %c0 = arith.constant 0 : index
    %c0_0 = arith.constant 0 : index
    %c0_1 = arith.constant 0 : index
    %2 = vector.load %arg3[%c0, %c0_0, %c0_1] : memref<1x2x128xf32, #tpu.memory_space<vmem>>, vector<1x2x128xf32>
    %3 = math.log %2 : vector<1x2x128xf32>
    %4 = vector.broadcast %1 : f32 to vector<1x2x128xf32>
    %5 = arith.mulf %4, %3 : vector<1x2x128xf32>
    %6 = math.exp %5 : vector<1x2x128xf32>
    %cst = arith.constant 0.000000e+00 : f32
    %cst_2 = arith.constant 1.000000e+00 : f32
    %7 = vector.broadcast %cst : f32 to vector<1x2x128xf32>
    %8 = arith.maximumf %7, %6 : vector<1x2x128xf32>
    %9 = vector.broadcast %cst_2 : f32 to vector<1x2x128xf32>
    %10 = arith.minimumf %9, %8 : vector<1x2x128xf32>
    %c0_3 = arith.constant 0 : index
    %c0_4 = arith.constant 0 : index
    %c0_5 = arith.constant 0 : index
    %11 = vector.load %arg4[%c0_3, %c0_4, %c0_5] : memref<1x2x128xf32, #tpu.memory_space<vmem>>, vector<1x2x128xf32>
    tpu.vector_store %arg4[%c0_3, %c0_4, %c0_5], %10 {strides = array<i32>} : memref<1x2x128xf32, #tpu.memory_space<vmem>>, vector<1x2x128xf32>,
    return
  }
  func.func @transform_0(%arg0: i32, %arg1: i32, %arg2: memref<4xf32, #tpu.memory_space<smem>>) -> (i32, i32, i32) {
    %c0_i32 = arith.constant 0 : i32
    %c0_i32_0 = arith.constant 0 : i32
    return %arg0, %arg1, %c0_i32 : i32, i32, i32
  }
  func.func @transform_1(%arg0: i32, %arg1: i32, %arg2: memref<4xf32, #tpu.memory_space<smem>>) -> (i32, i32, i32) {
    %c0_i32 = arith.constant 0 : i32
    %c0_i32_0 = arith.constant 0 : i32
    return %arg0, %arg1, %c0_i32 : i32, i32, i32
  }
}

</mosaic_0001>

<llo_original>
// kernel: tpu_custom_call.1
$region0: #{tpu_custom_call.1}
  #allocation0 [shape = 'u32[]', space=smem, size = 0x4, offset = 0x4, fixed_abs, tag = 'smem constant byte address 0x4 - core index']
  #allocation1 [shape = 'u32[144,128]{1,0:T(1,128)}', space=vmem, size = 0x12000, scoped, tag = 'internal scratch']
  #allocation2 [shape = 's32[1]{0}', space=sflag, size = 0x4, scoped, tag = 'scoped memory for tpu_custom_call.1']
  #allocation3 [shape = 'u8[512]{0}', space=smem, size = 0x200, scoped, tag = 'prefetched SMEM operand 0']
  %s0 = inlined_call_operand.hbm [shape: f32[4], index: 0, kind: input, shape index: {}]
  %s1 = inlined_call_operand.hbm [shape: f32[4,2,128], index: 1, kind: input, shape index: {}]
  %s2 = inlined_call_operand.hbm [shape: f32[4,2,128], index: 2, kind: output, shape index: {}]
  %s3 = sld [smem:[#allocation0]]
  $region41: #{tpu_custom_call.1} parent=0
    _
  %s5 = ssub.s32 1, %s3
  %s6 = scalar_select 0, %s5, %s3
  %8 = dma.hbm_to_smem %s0, 16, [#allocation3], [#allocation2]
  %9 = dma.done [#allocation2], 16
  %10 = sfence
  $region1: #{tpu_custom_call.1} parent=0
    #allocation4 [shape = 'u8[2048]{0}', space=vmem, size = 0x800, scoped, tag = 'input window, operand 1']
    #allocation5 [shape = 's32[2]{0}', space=sflag, size = 0x8, scoped, tag = 'scoped memory for tpu_custom_call.1']
    #allocation6 [shape = 's32[2]{0}', space=sflag, size = 0x8, scoped, tag = 'scoped memory for tpu_custom_call.1']
    #allocation7 [shape = 'u8[2048]{0}', space=vmem, size = 0x800, scoped, tag = 'output window, operand 0']
    %11 = vsyncpa [#allocation5], 0
    %s12 = scalar_lea.sflag [#allocation5], 1
    %13 = vsyncpa %s12, 0
    %14 = vsyncpa [#allocation6], 0
    %s15 = scalar_lea.sflag [#allocation6], 1
    %16 = vsyncpa %s15, 0
    loop: start=0, step=1, limit=6
    $region2: #{tpu_custom_call.1} parent=1 // loop_pre_header
      _
    $region3: #{tpu_custom_call.1} parent=1 // loop_header
      %s18 = sphi 0, %s22
      %p19 = scmp.ge.s32.totalorder %s18, 6
      %s25 = sphi 0, %s37
      %s26 = sphi 0, %s33
      %s27 = sphi 0, %s25
      %s28 = sphi 0, %s26
      %s29 = sphi 0, %s27
      %s30 = sphi 0, %s28
      %s42 = sphi 0, %s44
      %s45 = sphi 0, %s42
      %s46 = sphi 0, %s45
      %s62 = sphi 0, %s46
      %s70 = sphi 0, %s72
      %s73 = sphi 0, %s70
      %s74 = sphi 0, %s73
      %s90 = sphi 0, %s74
    $region4: #{tpu_custom_call.1} parent=1 // loop_header_branch
      %21 = sbr.rel (%p19) target = $region8
    $region5: #{tpu_custom_call.1} parent=1 // loop_body
      %s23 = ssub.s32 %s18, 1
      %s24 = ssub.s32 %s18, 2
      %s31 = sadd.s32 1, %s26
      %p32 = scmp.ge.s32.totalorder %s31, 1
      %s33 = scalar_select %p32, 0, %s31
      %s34 = sadd.s32 1, %s25
      %s35 = scalar_select %p32, %s34, %s25
      %p36 = scmp.ge.s32.totalorder %s35, 4
      %s37 = scalar_select %p36, 0, %s35
      %s38 = ssub.s32 %s25, %s37
      %s39 = ssub.s32 %s26, %s33
      %s40 = sor.u32 %s38, %s39
      %p41 = scmp.eq.s32.totalorder %s40, 0
      %s43 = sadd.s32 %s42, 1
      %s44 = scalar_select %p41, %s42, %s43
      %p47 = pneg %p41
      %p48 = scmp.eq.s32.totalorder %s18, 3
      %p49 = por %p47, %p48
      %p50 = scmp.ne.s32.totalorder %s42, %s45
      %p51 = scmp.eq.s32.totalorder %s18, 0
      %p52 = por %p50, %p51
      %p53 = scmp.ne.s32.totalorder %s42, %s45
      %p54 = scmp.eq.s32.totalorder %s23, 3
      %p55 = por %p53, %p54
      %p56 = scmp.ne.s32.totalorder %s45, %s46
      %p57 = scmp.eq.s32.totalorder %s23, 0
      %p58 = por %p56, %p57
      %p59 = scmp.ne.s32.totalorder %s45, %s46
      %p60 = scmp.eq.s32.totalorder %s24, 3
      %p61 = por %p59, %p60
      %p63 = scmp.ne.s32.totalorder %s46, %s62
      %p64 = scmp.eq.s32.totalorder %s24, 0
      %p65 = por %p63, %p64
      %s66 = ssub.s32 %s25, %s37
      %s67 = ssub.s32 %s26, %s33
      %s68 = sor.u32 %s66, %s67
      %p69 = scmp.eq.s32.totalorder %s68, 0
      %s71 = sadd.s32 %s70, 1
      %s72 = scalar_select %p69, %s70, %s71
      %p75 = pneg %p69
      %p76 = scmp.eq.s32.totalorder %s18, 3
      %p77 = por %p75, %p76
      %p78 = scmp.ne.s32.totalorder %s70, %s73
      %p79 = scmp.eq.s32.totalorder %s18, 0
      %p80 = por %p78, %p79
      %p81 = scmp.ne.s32.totalorder %s70, %s73
      %p82 = scmp.eq.s32.totalorder %s23, 3
      %p83 = por %p81, %p82
      %p84 = scmp.ne.s32.totalorder %s73, %s74
      %p85 = scmp.eq.s32.totalorder %s23, 0
      %p86 = por %p84, %p85
      %p87 = scmp.ne.s32.totalorder %s73, %s74
      %p88 = scmp.eq.s32.totalorder %s24, 3
      %p89 = por %p87, %p88
      %p91 = scmp.ne.s32.totalorder %s74, %s90
      %p92 = scmp.eq.s32.totalorder %s24, 0
      %p93 = por %p91, %p92
      %p94 = scmp.le.s32.totalorder 1, %s18
      %p95 = scmp.lt.s32.totalorder %s18, 5
      %p96 = pnand %p94, %p95
      %p97 = pneg %p96
      // Predicated region
      $region9: #{tpu_custom_call.1} parent=5 // pred_check
        _
      $region10: #{tpu_custom_call.1} parent=5 // pred_check_branch
        %99 = sbr.rel (%p96) target = $region12
      $region11: #{tpu_custom_call.1} parent=5 // pred_region
        %s100 = ssub.s32 %s18, 1
      $region12: #{tpu_custom_call.1} parent=5 // pred_fallthru
        _
      %p101 = scmp.lt.s32.totalorder %s18, 4
      // Predicated region
      $region13: #{tpu_custom_call.1} parent=5 // pred_check
        %p102 = pneg %p101
      $region14: #{tpu_custom_call.1} parent=5 // pred_check_branch
        %104 = sbr.rel (%p102) target = $region16
      $region15: #{tpu_custom_call.1} parent=5 // pred_region
        // Predicated region
        $region17: #{tpu_custom_call.1} parent=15 // pred_check
          %p105 = pneg %p52
        $region18: #{tpu_custom_call.1} parent=15 // pred_check_branch
          %107 = sbr.rel (%p105) target = $region20
        $region19: #{tpu_custom_call.1} parent=15 // pred_region
          %s108 = sand.u32 %s42, 1
          %s109 = scalar_lea.sflag [#allocation5], %s108
          %s110 = sand.u32 %s42, 1
          %s111 = smul.addr %s110, 2
          %s112 = scalar_lea.vmem [#allocation4], %s111
          %s114 = ssub.s32 32, 32
          %115 = vsyncadd %s109, %s114
          %s116 = sadd.s32 %s26, %s25
          %s117 = smul.addr %s116, 32
          %s118 = scalar_lea.hbm %s1, %s117
          %s120 = sshll.u32 %s112, 4
          %s121 = int_to_ptr.vmem [resolvable:$true] %s120
          %123 = dma.hbm_to_vmem [thread:$0]  %s118, 32, %s121, %s109
        $region20: #{tpu_custom_call.1} parent=15 // pred_fallthru
          _
      $region16: #{tpu_custom_call.1} parent=5 // pred_fallthru
        _
      %p124 = scmp.le.s32.totalorder 1, %s18
      %p125 = scmp.lt.s32.totalorder %s18, 5
      %p126 = pnand %p124, %p125
      %p127 = pneg %p126
      // Predicated region
      $region21: #{tpu_custom_call.1} parent=5 // pred_check
        _
      $region22: #{tpu_custom_call.1} parent=5 // pred_check_branch
        %129 = sbr.rel (%p126) target = $region24
      $region23: #{tpu_custom_call.1} parent=5 // pred_region
        %s130 = ssub.s32 %s18, 1
        %s131 = sand.u32 %s45, 1
        %s132 = scalar_lea.sflag [#allocation5], %s131
        %s133 = sand.u32 %s45, 1
        %s134 = smul.addr %s133, 2
        %s135 = scalar_lea.vmem [#allocation4], %s134
        // Predicated region
        $region25: #{tpu_custom_call.1} parent=23 // pred_check
          %p136 = pneg %p58
        $region26: #{tpu_custom_call.1} parent=23 // pred_check_branch
          %138 = sbr.rel (%p136) target = $region28
        $region27: #{tpu_custom_call.1} parent=23 // pred_region
          %139 = dma.done %s132, 32
        $region28: #{tpu_custom_call.1} parent=23 // pred_fallthru
          _
        %s140 = sand.u32 %s45, 1
        %s141 = scalar_lea.sflag [#allocation5], %s140
        %s142 = sand.u32 %s45, 1
        %s143 = smul.addr %s142, 2
        %s144 = scalar_lea.vmem [#allocation4], %s143
        %p145 = pneg %p58
        %p146 = pneg %p55
        %p147 = pneg %p86
        %p148 = pneg %p83
        %s149 = sand.u32 %s73, 1
        %s150 = scalar_lea.sflag [#allocation6], %s149
        %s151 = sand.u32 %s73, 1
        %s152 = smul.addr %s151, 2
        %s153 = scalar_lea.vmem [#allocation7], %s152
        %s154 = sld [smem:[#allocation3 + %s27]]
        %v155 = vld [vmem:[%s135] sm:$0x3]
        %v156 = vlog2.pop %v155
        %v157 = vmul.f32 %v156, 0.6931472
        %v158 = vstv %s154
        %v159 = vmul.f32 %v158, %v157
        %v160 = vmul.f32 %v159, 1.442695
        %v161 = vpow.pop %v160
        %v162 = vmax.f32 %v161, 0.0
        %v163 = vmin.f32 %v162, 1.0
        %164 = vst [vmem:[%s153] sm:$0x3] %v163
        %s165 = sand.u32 %s73, 1
        %s166 = scalar_lea.sflag [#allocation6], %s165
        %s167 = sand.u32 %s73, 1
        %s168 = smul.addr %s167, 2
        %s169 = scalar_lea.vmem [#allocation7], %s168
        // Predicated region
        $region29: #{tpu_custom_call.1} parent=23 // pred_check
          %p170 = pneg %p83
        $region30: #{tpu_custom_call.1} parent=23 // pred_check_branch
          %172 = sbr.rel (%p170) target = $region32
        $region31: #{tpu_custom_call.1} parent=23 // pred_region
          %s174 = ssub.s32 32, 32
          %175 = vsyncadd %s166, %s174
          %s176 = sadd.s32 %s28, %s27
          %s177 = smul.addr %s176, 32
          %s178 = scalar_lea.hbm %s2, %s177
          %s180 = sshll.u32 %s169, 4
          %s181 = int_to_ptr.vmem [resolvable:$true] %s180
          %183 = dma.vmem_to_hbm [thread:$0]  %s181, 32, %s178, %s166
        $region32: #{tpu_custom_call.1} parent=23 // pred_fallthru
          _
      $region24: #{tpu_custom_call.1} parent=5 // pred_fallthru
        _
      %p184 = scmp.le.s32.totalorder 2, %s18
      // Predicated region
      $region33: #{tpu_custom_call.1} parent=5 // pred_check
        %p185 = pneg %p184
      $region34: #{tpu_custom_call.1} parent=5 // pred_check_branch
        %187 = sbr.rel (%p185) target = $region36
      $region35: #{tpu_custom_call.1} parent=5 // pred_region
        %s188 = ssub.s32 %s18, 2
        // Predicated region
        $region37: #{tpu_custom_call.1} parent=35 // pred_check
          %p189 = pneg %p89
        $region38: #{tpu_custom_call.1} parent=35 // pred_check_branch
          %191 = sbr.rel (%p189) target = $region40
        $region39: #{tpu_custom_call.1} parent=35 // pred_region
          %s192 = sand.u32 %s74, 1
          %s193 = scalar_lea.sflag [#allocation6], %s192
          %s194 = sand.u32 %s74, 1
          %s195 = smul.addr %s194, 2
          %s196 = scalar_lea.vmem [#allocation7], %s195
          %197 = dma.done %s193, 32
        $region40: #{tpu_custom_call.1} parent=35 // pred_fallthru
          _
      $region36: #{tpu_custom_call.1} parent=5 // pred_fallthru
        _
    $region6: #{tpu_custom_call.1} parent=1 // loop_footer
      %s22 = sadd.s32 1, %s18
    $region7: #{tpu_custom_call.1} parent=1 // loop_footer_branch
      %17 = sbr.rel target = $region3
    $region8: #{tpu_custom_call.1} parent=1 // loop_exit
      _
    %198 = vsyncpa [#allocation5], 1
    %s199 = scalar_lea.sflag [#allocation5], 1
    %200 = vsyncpa %s199, 1
    %201 = vsyncpa [#allocation6], 1
    %s202 = scalar_lea.sflag [#allocation6], 1
    %203 = vsyncpa %s202, 1

</llo_original>
